<compile_context>
chip_gen: v6e
topology: v6e:2x2x1
jax: 0.10.0
libtpu: 0.0.40
codegen_flags: <defaults>
</compile_context>

<pallas_src>
import jax
import jax.numpy as jnp
from jax.experimental import pallas as pl
from jax.experimental.pallas import tpu as pltpu


def _cdiv(a: int, b: int) -> int:
    return -(-a // b)


def _linreg_kernel(w_ref, b_ref, x_ref, o_ref):
    # w_ref, b_ref are shape-(1,) scalars in SMEM; x_ref/o_ref are VMEM tiles.
    w = w_ref[0]
    b = b_ref[0]
    o_ref[...] = (w * x_ref[...] + b).astype(o_ref.dtype)


def _vmem_budgets():
    """(per-tile byte budget, vmem_limit_bytes) sized to this chip's VMEM."""
    phys = 64 << 20  # conservative default = v7x per-TC physical VMEM
    try:
        info = pltpu.get_tpu_info()
        phys = int(getattr(info, "vmem_capacity_bytes", phys))
    except Exception:
        pass
    # Leave headroom under physical VMEM (critical on v7x's 64 MiB), cap at 64 MiB.
    vmem_limit = min(phys * 3 // 4, 64 << 20)
    # 2 inputs-buffers + 2 output-buffers of one tile each must fit comfortably.
    tile_budget = max(1 << 20, vmem_limit // 8)
    return tile_budget, vmem_limit


def _choose_tiles(rows: int, cols: int, itemsize: int, budget_bytes: int, sub_align: int):
    """Pick (tile_r, tile_c): lane-dense, sublane-aligned, bounded by budget_bytes."""
    # Column tile: full width if a sub_align-row stripe fits the budget, else a large
    # multiple of 128 (cols is a multiple of 128 whenever this branch is reachable).
    if cols <= 128 or cols * itemsize * sub_align <= budget_bytes:
        tile_c = cols
    else:
        max_c = budget_bytes // (itemsize * sub_align)
        tile_c = max(128, (max_c // 128) * 128)
        tile_c = min(tile_c, (cols // 128) * 128)

    # Row tile: as many sublane-aligned rows as fit the budget, no artificial cap.
    if rows <= sub_align:
        tile_r = rows
    else:
        bytes_per_row = max(tile_c * itemsize, 1)
        rows_by_budget = max(sub_align, (budget_bytes // bytes_per_row) // sub_align * sub_align)
        rows_aligned = max(sub_align, (rows // sub_align) * sub_align)
        tile_r = min(rows_by_budget, rows_aligned)
        # Keep at least 2 row tiles when possible so v7x can shard the "parallel"
        # axis across its 2 TensorCores (and the DMA pipeline has >1 step).
        if tile_r >= rows and rows >= 2 * sub_align:
            half = max(sub_align, _cdiv(_cdiv(rows, 2), sub_align) * sub_align)
            tile_r = min(tile_r, half)
    return tile_r, tile_c


def linear_regressions_forward(x: jax.Array, weights: jax.Array, bias: jax.Array) -> jax.Array:
    """y = weights * x + bias; weights/bias are shape-(1,) float32 parameters."""
    orig_shape = x.shape
    n = int(x.size)
    if n == 0:
        return x

    itemsize = x.dtype.itemsize
    sub_align = max(8, 32 // max(itemsize, 1))  # 8 for f32, 16 for bf16, 32 for int8/fp8
    tile_budget, vmem_limit = _vmem_budgets()

    last = orig_shape[-1] if x.ndim >= 1 else 1
    # Lane-dense layout: keep a native 2-D view only if the last dim already maps cleanly
    # onto full 128-lane vregs; otherwise reflow (the op is elementwise, so this is free
    # semantically) so every store is an unmasked, lane-dense vst.
    use_native_2d = x.ndim >= 2 and last % 128 == 0
    pad = 0
    if use_native_2d:
        x2 = x.reshape(-1, last)
    else:
        reflow_c = 512  # large multiple of 128
        flat = x.reshape(-1)
        pad = (-n) % reflow_c
        if pad:
            flat = jnp.pad(flat, (0, pad))
        x2 = flat.reshape(-1, reflow_c)

    rows, cols = x2.shape
    tile_r, tile_c = _choose_tiles(rows, cols, itemsize, tile_budget, sub_align)
    grid_r = _cdiv(rows, tile_r)
    grid_c = _cdiv(cols, tile_c)

    y2 = pl.pallas_call(
        _linreg_kernel,
        out_shape=jax.ShapeDtypeStruct((rows, cols), x2.dtype),
        grid_spec=pltpu.PrefetchScalarGridSpec(
            num_scalar_prefetch=0,
            grid=(grid_r, grid_c),
            in_specs=[
                pl.BlockSpec(memory_space=pltpu.SMEM),                 # weights (1,)
                pl.BlockSpec(memory_space=pltpu.SMEM),                 # bias (1,)
                pl.BlockSpec((tile_r, tile_c), lambda i, j: (i, j)),   # x tile in VMEM
            ],
            out_specs=pl.BlockSpec((tile_r, tile_c), lambda i, j: (i, j)),
        ),
        compiler_params=pltpu.CompilerParams(
            # All tiles independent -> both axes parallel; v7x shards them across its 2 TCs.
            dimension_semantics=("parallel", "parallel"),
            vmem_limit_bytes=vmem_limit,
        ),
    )(weights, bias, x2)

    if use_native_2d:
        return y2.reshape(orig_shape)
    y = y2.reshape(-1)
    if pad:
        y = y[:n]
    return y.reshape(orig_shape)


if __name__ == "__main__":
    key = jax.random.PRNGKey(0)
    k_w, k_b, k_x1, k_x2, k_x3 = jax.random.split(key, 5)

    # Deterministic parameter init (mirrors torch.randn(1) for weights and bias).
    weights = jax.random.normal(k_w, (1,), dtype=jnp.float32)
    bias = jax.random.normal(k_b, (1,), dtype=jnp.float32)

    # Case 1: classic regression input (N samples, 1 feature) -> exercises lane-dense reflow.
    x1 = jax.random.normal(k_x1, (64, 1), dtype=jnp.float32)
    y1 = jax.block_until_ready(linear_regressions_forward(x1, weights, bias))
    y1_ref = weights[0] * x1 + bias[0]
    assert y1.shape == x1.shape and y1.dtype == x1.dtype
    assert jnp.allclose(y1, y1_ref, atol=1e-6, rtol=1e-6)

    # Case 2: native lane-dense 2-D path with >=2 row tiles (pipelined / megacore-shardable).
    x2 = jax.random.normal(k_x2, (256, 384), dtype=jnp.float32)
    y2 = jax.block_until_ready(linear_regressions_forward(x2, weights, bias))
    y2_ref = weights[0] * x2 + bias[0]
    assert y2.shape == x2.shape and y2.dtype == x2.dtype
    assert jnp.allclose(y2, y2_ref, atol=1e-6, rtol=1e-6)

    # Case 3: 1-D input with a ragged length -> reflow + tail padding path.
    x3 = jax.random.normal(k_x3, (1000,), dtype=jnp.float32)
    y3 = jax.block_until_ready(linear_regressions_forward(x3, weights, bias))
    y3_ref = weights[0] * x3 + bias[0]
    assert y3.shape == x3.shape and y3.dtype == x3.dtype
    assert jnp.allclose(y3, y3_ref, atol=1e-6, rtol=1e-6)

    print("KERNEL_OK")
</pallas_src>

<mosaic_0001>
module attributes {stable_mosaic.version = 11 : i64} {
  func.func @_linreg_kernel(%arg0: i32, %arg1: i32, %arg2: memref<1xf32, #tpu.memory_space<smem>>, %arg3: memref<1xf32, #tpu.memory_space<smem>>, %arg4: memref<1x512xf32, #tpu.memory_space<vmem>>, %arg5: memref<1x512xf32, #tpu.memory_space<vmem>>) attributes {dimension_semantics = [#tpu.dimension_semantics<parallel>, #tpu.dimension_semantics<parallel>], iteration_bounds = array<i64: 1, 1>, scalar_prefetch = 0 : i64, scratch_operands = 0 : i64, tpu.core_type = #tpu.core_type<tc>, window_params = [{transform_indices = @transform_0, window_bounds = array<i64: 1>}, {transform_indices = @transform_1, window_bounds = array<i64: 1>}, {transform_indices = @transform_2, window_bounds = array<i64: 1, 512>}, {transform_indices = @transform_3, window_bounds = array<i64: 1, 512>}]} {
    %c0 = arith.constant 0 : index
    %0 = memref.load %arg2[%c0] : memref<1xf32, #tpu.memory_space<smem>>
    %c0_0 = arith.constant 0 : index
    %1 = memref.load %arg3[%c0_0] : memref<1xf32, #tpu.memory_space<smem>>
    %c0_1 = arith.constant 0 : index
    %c0_2 = arith.constant 0 : index
    %2 = vector.load %arg4[%c0_1, %c0_2] : memref<1x512xf32, #tpu.memory_space<vmem>>, vector<1x512xf32>
    %3 = vector.broadcast %0 : f32 to vector<1x512xf32>
    %4 = arith.mulf %3, %2 : vector<1x512xf32>
    %5 = vector.broadcast %1 : f32 to vector<1x512xf32>
    %6 = arith.addf %4, %5 : vector<1x512xf32>
    %c0_3 = arith.constant 0 : index
    %c0_4 = arith.constant 0 : index
    %7 = vector.load %arg5[%c0_3, %c0_4] : memref<1x512xf32, #tpu.memory_space<vmem>>, vector<1x512xf32>
    tpu.vector_store %arg5[%c0_3, %c0_4], %6 {strides = array<i32>} : memref<1x512xf32, #tpu.memory_space<vmem>>, vector<1x512xf32>,
    return
  }
  func.func @transform_0(%arg0: i32, %arg1: i32) -> i32 {
    %c0_i32 = arith.constant 0 : i32
    %c0_i32_0 = arith.constant 0 : i32
    return %c0_i32 : i32
  }
  func.func @transform_1(%arg0: i32, %arg1: i32) -> i32 {
    %c0_i32 = arith.constant 0 : i32
    %c0_i32_0 = arith.constant 0 : i32
    return %c0_i32 : i32
  }
  func.func @transform_2(%arg0: i32, %arg1: i32) -> (i32, i32) {
    %c0_i32 = arith.constant 0 : i32
    return %arg0, %arg1 : i32, i32
  }
  func.func @transform_3(%arg0: i32, %arg1: i32) -> (i32, i32) {
    %c0_i32 = arith.constant 0 : i32
    return %arg0, %arg1 : i32, i32
  }
}

</mosaic_0001>

<llo_original>
// kernel: tpu_custom_call.1
$region0: #{tpu_custom_call.1}
  #allocation0 [shape = 'u32[]', space=smem, size = 0x4, offset = 0x4, fixed_abs, tag = 'smem constant byte address 0x4 - core index']
  #allocation1 [shape = 'u32[144,128]{1,0:T(1,128)}', space=vmem, size = 0x12000, scoped, tag = 'internal scratch']
  #allocation2 [shape = 'f32[1]{0:T(128)S(6)}', space=smem, size = 0x200, scoped, tag = 'scoped memory for tpu_custom_call.1']
  #allocation3 [shape = 'f32[1]{0:T(128)S(6)}', space=smem, size = 0x200, scoped, tag = 'scoped memory for tpu_custom_call.1']
  %s0 = inlined_call_operand.<no memory space> [shape: f32[1], index: 0, kind: input, shape index: {}]
  %s1 = inlined_call_operand.<no memory space> [shape: f32[1], index: 1, kind: input, shape index: {}]
  %s2 = inlined_call_operand.vmem [shape: f32[1,512], index: 2, kind: input, shape index: {}]
  %s3 = inlined_call_operand.hbm [shape: f32[1,512], index: 3, kind: output, shape index: {}]
  %s4 = sld [smem:[#allocation0]]
  $region22: #{tpu_custom_call.1} parent=0
    _
  %s6 = ssub.s32 1, %s4
  %s7 = scalar_select 0, %s6, %s4
  %8 = sst [smem:[#allocation2]] %s0
  %9 = sst [smem:[#allocation3]] %s1
  $region1: #{tpu_custom_call.1} parent=0
    #allocation4 [shape = 'u8[2048]{0}', space=vmem, size = 0x800, scoped, tag = 'output window, operand 0, single buffered']
    #allocation5 [shape = 's32[1]{0}', space=sflag, size = 0x4, scoped, tag = 'scoped memory for tpu_custom_call.1']
    %10 = vsyncpa [#allocation5], 0
    // Predicated region
    $region2: #{tpu_custom_call.1} parent=1 // pred_check
      _
    $region3: #{tpu_custom_call.1} parent=1 // pred_check_branch
      %12 = sbr.rel (0) target = $region5
    $region4: #{tpu_custom_call.1} parent=1 // pred_region
      _
    $region5: #{tpu_custom_call.1} parent=1 // pred_fallthru
      _
    // Predicated region
    $region6: #{tpu_custom_call.1} parent=1 // pred_check
      _
    $region7: #{tpu_custom_call.1} parent=1 // pred_check_branch
      %14 = sbr.rel (0) target = $region9
    $region8: #{tpu_custom_call.1} parent=1 // pred_region
      _
    $region9: #{tpu_custom_call.1} parent=1 // pred_fallthru
      _
    // Predicated region
    $region10: #{tpu_custom_call.1} parent=1 // pred_check
      _
    $region11: #{tpu_custom_call.1} parent=1 // pred_check_branch
      %16 = sbr.rel (0) target = $region13
    $region12: #{tpu_custom_call.1} parent=1 // pred_region
      _
    $region13: #{tpu_custom_call.1} parent=1 // pred_fallthru
      _
    %s17 = sld [smem:[#allocation2]]
    %s18 = sld [smem:[#allocation3]]
    %v19 = vld [vmem:[%s2] sm:$0xf]
    %v20 = vstv %s17
    %v21 = vmul.f32 %v20, %v19
    %v22 = vstv %s18
    %v23 = vadd.f32 %v21, %v22
    %v24 = vlaneseq
    %vm25 = vcmp.ge.s32.totalorder %v24, 0
    %vm26 = vcmp.lt.s32.totalorder %v24, 512
    %vm27 = vmand %vm25, %vm26
    %28 = vst.msk [vmem:[#allocation4] sm:$0xf] %vm27, %v23
    // Predicated region
    $region14: #{tpu_custom_call.1} parent=1 // pred_check
      _
    $region15: #{tpu_custom_call.1} parent=1 // pred_check_branch
      %30 = sbr.rel (0) target = $region17
    $region16: #{tpu_custom_call.1} parent=1 // pred_region
      %s32 = ssub.s32 64, 64
      %33 = vsyncadd [#allocation5], %s32
      %s35 = sshll.u32 [#allocation4], 4
      %s36 = int_to_ptr.vmem [resolvable:$true] %s35
      %38 = dma.vmem_to_hbm [thread:$0]  %s36, 64, %s3, [#allocation5]
    $region17: #{tpu_custom_call.1} parent=1 // pred_fallthru
      _
    // Predicated region
    $region18: #{tpu_custom_call.1} parent=1 // pred_check
      _
    $region19: #{tpu_custom_call.1} parent=1 // pred_check_branch
      %40 = sbr.rel (0) target = $region21
    $region20: #{tpu_custom_call.1} parent=1 // pred_region
      %41 = dma.done [#allocation5], 64
    $region21: #{tpu_custom_call.1} parent=1 // pred_fallthru
      _
    %42 = vsyncpa [#allocation5], 1

</llo_original>
